<compile_context>
chip_gen: v7x
topology: tpu7x:2x2x1
jax: 0.10.0
libtpu: 0.0.40
codegen_flags: <defaults>
</compile_context>

<pallas_src>
import functools

import jax
import jax.numpy as jnp
from jax import lax
from jax.experimental import pallas as pl
from jax.experimental.pallas import tpu as pltpu


def _round_up(x, m):
    return ((x + m - 1) // m) * m


# ---------------------------------------------------------------------------
# Fused kernel: patch embed -> pooled accumulator -> head -> inf fix -> L2 norm
# ---------------------------------------------------------------------------
def _fused_extractor_kernel(x_ref, wp_ref, bp_ref, wh_ref, bh_ref, o_ref,
                            acc_ref, *, inv_p):
    # x_ref : (TP, Kp)   bf16 patch tile (batch dim squeezed)
    # wp_ref: (Kp, Ep)   bf16 patch-embed weight
    # bp_ref: (1, Ep)    f32 patch-embed bias
    # wh_ref: (Ep, Fp)   f32 head weight
    # bh_ref: (1, Fp)    f32 head bias
    # o_ref : (1, Fp)    f32 normalized feature row for this batch element
    # acc_ref: (1, Ep)   f32 running sum of token features over patch tiles
    t = pl.program_id(1)

    @pl.when(t == 0)
    def _init():
        acc_ref[...] = jnp.zeros_like(acc_ref)

    # Patch embedding for this tile: (TP, Kp) @ (Kp, Ep) on the MXU (bf16
    # operands, f32 accumulation).  Zero-padded patch rows / K columns
    # contribute nothing because the bias is added once after pooling.
    tok = jnp.dot(x_ref[...], wp_ref[...], preferred_element_type=jnp.float32)

    # Sum over the patch rows as a second MXU matmul (avoids an XLU
    # cross-sublane reduce): (1, TP) @ (TP, Ep) -> (1, Ep).
    ones_row = jnp.ones((1, tok.shape[0]), jnp.float32)
    acc_ref[...] += jnp.dot(ones_row, tok, preferred_element_type=jnp.float32)

    @pl.when(t == pl.num_programs(1) - 1)
    def _finalize():
        # mean(x @ W + b) == (sum(x) @ W) / P + b
        pooled = acc_ref[...] * jnp.float32(inv_p) + bp_ref[...]       # (1, Ep)
        feat = jnp.dot(pooled, wh_ref[...],
                       preferred_element_type=jnp.float32) + bh_ref[...]  # (1, Fp)
        # postprocessing: feats[isinf] = 1.0 ; F.normalize(feats, dim=1)
        feat = jnp.where(jnp.isinf(feat), jnp.float32(1.0), feat)
        ssq = jnp.sum(feat * feat, axis=1, keepdims=True)
        # sqrt(max(ssq, eps^2)) == clamp_min(norm, eps)  (F.normalize, eps=1e-12)
        inv_norm = lax.rsqrt(jnp.maximum(ssq, jnp.float32(1e-24)))
        o_ref[...] = feat * inv_norm


# ---------------------------------------------------------------------------
# Wrapper mirroring SOLIDERExtractor.forward (no frame / PIL preprocessing path)
# ---------------------------------------------------------------------------
@functools.partial(jax.jit, static_argnames=("patch", "tile_p"))
def solider_extractor_forward(x_nchw, params, patch=4, tile_p=256):
    B, C, H, W = x_nchw.shape
    ph, pw = H // patch, W // patch
    P = ph * pw                      # patches per image
    K = C * patch * patch            # flattened patch size

    E = params["w_patch"].shape[1]
    F = params["w_head"].shape[1]

    # Glue: NCHW -> (B, P, K) patch slabs with the feature axis last.
    # TODO(synk): fold this layout change into the kernel's index_map (strided
    # gather) or pre-lay out inputs channel-last upstream to save an HBM pass.
    patches = (
        x_nchw.reshape(B, C, ph, patch, pw, patch)
        .transpose(0, 2, 4, 1, 3, 5)
        .reshape(B, P, K)
    )

    # Lane-dense padding: K/E/F up to multiples of 128, patch count up to a
    # multiple of the (<=256-row) M tile.  All padding is zeros and exact.
    Kp = _round_up(K, 128)
    Ep = _round_up(E, 128)
    Fp = _round_up(F, 128)
    TP = _round_up(min(P, tile_p), 8)
    T = pl.cdiv(P, TP)
    P_pad = T * TP

    patches_p = jnp.zeros((B, P_pad, Kp), jnp.bfloat16).at[:, :P, :K].set(
        patches.astype(jnp.bfloat16))
    wp = jnp.zeros((Kp, Ep), jnp.bfloat16).at[:K, :E].set(
        params["w_patch"].astype(jnp.bfloat16))
    bp = jnp.zeros((1, Ep), jnp.float32).at[:, :E].set(params["b_patch"])
    wh = jnp.zeros((Ep, Fp), jnp.float32).at[:E, :F].set(params["w_head"])
    bh = jnp.zeros((1, Fp), jnp.float32).at[:, :F].set(params["b_head"])

    kernel = functools.partial(_fused_extractor_kernel, inv_p=1.0 / P)

    out = pl.pallas_call(
        kernel,
        out_shape=jax.ShapeDtypeStruct((B, 1, Fp), jnp.float32),
        grid_spec=pltpu.PrefetchScalarGridSpec(
            num_scalar_prefetch=0,
            grid=(B, T),
            in_specs=[
                pl.BlockSpec((None, TP, Kp), lambda b, t: (b, t, 0)),
                pl.BlockSpec((Kp, Ep), lambda b, t: (0, 0)),
                pl.BlockSpec((1, Ep), lambda b, t: (0, 0)),
                pl.BlockSpec((Ep, Fp), lambda b, t: (0, 0)),
                pl.BlockSpec((1, Fp), lambda b, t: (0, 0)),
            ],
            out_specs=pl.BlockSpec((None, 1, Fp), lambda b, t: (b, 0, 0)),
            scratch_shapes=[pltpu.VMEM((1, Ep), jnp.float32)],
        ),
        compiler_params=pltpu.CompilerParams(
            dimension_semantics=("parallel", "arbitrary")),
    )(patches_p, wp, bp, wh, bh)

    # Strip feature padding (zero columns; they do not affect the L2 norm).
    return out[:, 0, :F]


# ---------------------------------------------------------------------------
# Pure-JAX reference (same math, f32) for a correctness check
# ---------------------------------------------------------------------------
def _reference_forward(x_nchw, params, patch=4):
    B, C, H, W = x_nchw.shape
    ph, pw = H // patch, W // patch
    patches = (
        x_nchw.reshape(B, C, ph, patch, pw, patch)
        .transpose(0, 2, 4, 1, 3, 5)
        .reshape(B, ph * pw, C * patch * patch)
    )
    tokens = patches @ params["w_patch"] + params["b_patch"]   # (B, P, E)
    pooled = tokens.mean(axis=1)                               # (B, E)
    feat = pooled @ params["w_head"] + params["b_head"]        # (B, F)
    feat = jnp.where(jnp.isinf(feat), 1.0, feat)
    norm = jnp.sqrt(jnp.sum(feat * feat, axis=1, keepdims=True))
    return feat / jnp.maximum(norm, 1e-12)


def init_params(key, C=4, patch=4, embed_dim=32, feat_dim=32):
    k1, k2, k3, k4 = jax.random.split(key, 4)
    K = C * patch * patch
    # Conv2d(C, E, kernel=patch, stride=patch) weight (E, C, p, p) flattened.
    conv_w = jax.random.normal(k1, (embed_dim, C, patch, patch), jnp.float32) * 0.05
    w_patch = conv_w.reshape(embed_dim, K).T                   # (K, E)
    b_patch = jax.random.normal(k2, (1, embed_dim), jnp.float32) * 0.01
    w_head = jax.random.normal(k3, (embed_dim, feat_dim), jnp.float32) * 0.05
    b_head = jax.random.normal(k4, (1, feat_dim), jnp.float32) * 0.01
    return dict(w_patch=w_patch, b_patch=b_patch, w_head=w_head, b_head=b_head)


if __name__ == "__main__":
    key = jax.random.PRNGKey(0)
    kx, kp = jax.random.split(key)
    # Small NCHW input consistent with an image crop batch.
    x = jax.random.normal(kx, (2, 4, 16, 16), jnp.float32)
    params = init_params(kp, C=4, patch=4, embed_dim=32, feat_dim=32)

    out = solider_extractor_forward(x, params, patch=4)
    out = jax.block_until_ready(out)

    # Sanity: shape, finiteness, unit row norms, and agreement with f32 reference.
    assert out.shape == (2, 32)
    assert bool(jnp.all(jnp.isfinite(out)))
    row_norms = jnp.sqrt(jnp.sum(out * out, axis=1))
    assert bool(jnp.all(jnp.abs(row_norms - 1.0) < 1e-4))

    ref = _reference_forward(x, params, patch=4)
    assert bool(jnp.max(jnp.abs(out - ref)) < 5e-2)  # bf16 MXU operands vs f32 ref

    print("KERNEL_OK")
</pallas_src>

<mosaic_0001>
module attributes {stable_mosaic.version = 11 : i64} {
  func.func @_fused_extractor_kernel(%arg0: i32, %arg1: i32, %arg2: memref<1x16x128xbf16, #tpu.memory_space<vmem>>, %arg3: memref<128x128xbf16, #tpu.memory_space<vmem>>, %arg4: memref<1x128xf32, #tpu.memory_space<vmem>>, %arg5: memref<128x128xf32, #tpu.memory_space<vmem>>, %arg6: memref<1x128xf32, #tpu.memory_space<vmem>>, %arg7: memref<1x1x128xf32, #tpu.memory_space<vmem>>, %arg8: memref<1x128xf32, #tpu.memory_space<vmem>>) attributes {dimension_semantics = [#tpu.dimension_semantics<parallel>, #tpu.dimension_semantics<arbitrary>], iteration_bounds = array<i64: 2, 1>, scalar_prefetch = 0 : i64, scratch_operands = 1 : i64, tpu.core_type = #tpu.core_type<tc>, window_params = [{transform_indices = @transform_0, window_bounds = array<i64: 1, 16, 128>}, {pipeline_mode = #tpu.pipeline_mode<synchronous>, transform_indices = @transform_1, window_bounds = array<i64: 128, 128>}, {pipeline_mode = #tpu.pipeline_mode<synchronous>, transform_indices = @transform_2, window_bounds = array<i64: 1, 128>}, {pipeline_mode = #tpu.pipeline_mode<synchronous>, transform_indices = @transform_3, window_bounds = array<i64: 128, 128>}, {pipeline_mode = #tpu.pipeline_mode<synchronous>, transform_indices = @transform_4, window_bounds = array<i64: 1, 128>}, {transform_indices = @transform_5, window_bounds = array<i64: 1, 1, 128>}]} {
    %c0_i32 = arith.constant 0 : i32
    %0 = arith.cmpi eq, %arg1, %c0_i32 : i32
    %1 = arith.extui %0 : i1 to i32
    %c0_i32_0 = arith.constant 0 : i32
    %2 = arith.cmpi ne, %1, %c0_i32_0 : i32
    scf.if %2 {
      %cst_13 = arith.constant 0.000000e+00 : f32
      %15 = vector.broadcast %cst_13 : f32 to vector<1x128xf32>
      %c0_14 = arith.constant 0 : index
      %c0_15 = arith.constant 0 : index
      %16 = vector.load %arg8[%c0_14, %c0_15] : memref<1x128xf32, #tpu.memory_space<vmem>>, vector<1x128xf32>
      tpu.vector_store %arg8[%c0_14, %c0_15], %15 {strides = array<i32>} : memref<1x128xf32, #tpu.memory_space<vmem>>, vector<1x128xf32>,
    } else {
    }
    %c0 = arith.constant 0 : index
    %c0_1 = arith.constant 0 : index
    %c0_2 = arith.constant 0 : index
    %3 = vector.load %arg2[%c0, %c0_1, %c0_2] : memref<1x16x128xbf16, #tpu.memory_space<vmem>>, vector<1x16x128xbf16>
    %4 = vector.shape_cast %3 : vector<1x16x128xbf16> to vector<16x128xbf16>
    %c0_3 = arith.constant 0 : index
    %c0_4 = arith.constant 0 : index
    %5 = vector.load %arg3[%c0_3, %c0_4] : memref<128x128xbf16, #tpu.memory_space<vmem>>, vector<128x128xbf16>
    %cst = arith.constant dense<0.000000e+00> : vector<16x128xf32>
    %6 = tpu.matmul %4, %5, %cst {dimension_numbers = #tpu.dot_dimension_numbers<[1], [0], [0], [1], [0, 0, 1, 1], [], []>} : vector<16x128xbf16>, vector<128x128xbf16>, vector<16x128xf32> -> vector<16x128xf32>
    %cst_5 = arith.constant 1.000000e+00 : f32
    %7 = vector.broadcast %cst_5 : f32 to vector<1x16xf32>
    %c0_6 = arith.constant 0 : index
    %c0_7 = arith.constant 0 : index
    %8 = vector.load %arg8[%c0_6, %c0_7] : memref<1x128xf32, #tpu.memory_space<vmem>>, vector<1x128xf32>
    %cst_8 = arith.constant dense<0.000000e+00> : vector<1x128xf32>
    %9 = tpu.matmul %7, %6, %cst_8 {dimension_numbers = #tpu.dot_dimension_numbers<[1], [0], [0], [1], [0, 0, 1, 1], [], []>} : vector<1x16xf32>, vector<16x128xf32>, vector<1x128xf32> -> vector<1x128xf32>
    %10 = arith.addf %8, %9 : vector<1x128xf32>
    %c0_9 = arith.constant 0 : index
    %c0_10 = arith.constant 0 : index
    %11 = vector.load %arg8[%c0_9, %c0_10] : memref<1x128xf32, #tpu.memory_space<vmem>>, vector<1x128xf32>
    tpu.vector_store %arg8[%c0_9, %c0_10], %10 {strides = array<i32>} : memref<1x128xf32, #tpu.memory_space<vmem>>, vector<1x128xf32>,
    %c0_i32_11 = arith.constant 0 : i32
    %12 = arith.cmpi eq, %arg1, %c0_i32_11 : i32
    %13 = arith.extui %12 : i1 to i32
    %c0_i32_12 = arith.constant 0 : i32
    %14 = arith.cmpi ne, %13, %c0_i32_12 : i32
    scf.if %14 {
      %c0_13 = arith.constant 0 : index
      %c0_14 = arith.constant 0 : index
      %15 = vector.load %arg8[%c0_13, %c0_14] : memref<1x128xf32, #tpu.memory_space<vmem>>, vector<1x128xf32>
      %cst_15 = arith.constant 6.250000e-02 : f32
      %16 = vector.broadcast %cst_15 : f32 to vector<1x128xf32>
      %17 = arith.mulf %15, %16 : vector<1x128xf32>
      %c0_16 = arith.constant 0 : index
      %c0_17 = arith.constant 0 : index
      %18 = vector.load %arg4[%c0_16, %c0_17] : memref<1x128xf32, #tpu.memory_space<vmem>>, vector<1x128xf32>
      %19 = arith.addf %17, %18 : vector<1x128xf32>
      %c0_18 = arith.constant 0 : index
      %c0_19 = arith.constant 0 : index
      %20 = vector.load %arg5[%c0_18, %c0_19] : memref<128x128xf32, #tpu.memory_space<vmem>>, vector<128x128xf32>
      %cst_20 = arith.constant dense<0.000000e+00> : vector<1x128xf32>
      %21 = tpu.matmul %19, %20, %cst_20 {dimension_numbers = #tpu.dot_dimension_numbers<[1], [0], [0], [1], [0, 0, 1, 1], [], []>} : vector<1x128xf32>, vector<128x128xf32>, vector<1x128xf32> -> vector<1x128xf32>
      %c0_21 = arith.constant 0 : index
      %c0_22 = arith.constant 0 : index
      %22 = vector.load %arg6[%c0_21, %c0_22] : memref<1x128xf32, #tpu.memory_space<vmem>>, vector<1x128xf32>
      %23 = arith.addf %21, %22 : vector<1x128xf32>
      %24 = math.absf %23 : vector<1x128xf32>
      %cst_23 = arith.constant 0x7F800000 : f32
      %25 = vector.broadcast %cst_23 : f32 to vector<1x128xf32>
      %26 = arith.cmpf oeq, %24, %25 : vector<1x128xf32>
      %cst_24 = arith.constant 1.000000e+00 : f32
      %27 = vector.broadcast %cst_24 : f32 to vector<1x128xf32>
      %28 = arith.select %26, %27, %23 : vector<1x128xi1>, vector<1x128xf32>
      %29 = arith.mulf %28, %28 : vector<1x128xf32>
      %cst_25 = arith.constant dense<0.000000e+00> : vector<1xf32>
      %30 = vector.multi_reduction <add>, %29, %cst_25 [1] : vector<1x128xf32> to vector<1xf32>
      %31 = vector.shape_cast %30 : vector<1xf32> to vector<1x1xf32>
      %cst_26 = arith.constant 1.000000e-24 : f32
      %32 = vector.broadcast %cst_26 : f32 to vector<1x1xf32>
      %33 = arith.maximumf %31, %32 : vector<1x1xf32>
      %34 = math.rsqrt %33 : vector<1x1xf32>
      %35 = vector.broadcast %34 : vector<1x1xf32> to vector<1x128xf32>
      %36 = arith.mulf %28, %35 : vector<1x128xf32>
      %c0_27 = arith.constant 0 : index
      %c0_28 = arith.constant 0 : index
      %c0_29 = arith.constant 0 : index
      %37 = vector.load %arg7[%c0_27, %c0_28, %c0_29] : memref<1x1x128xf32, #tpu.memory_space<vmem>>, vector<1x1x128xf32>
      %38 = vector.shape_cast %37 : vector<1x1x128xf32> to vector<1x128xf32>
      %39 = vector.shape_cast %36 : vector<1x128xf32> to vector<1x1x128xf32>
      tpu.vector_store %arg7[%c0_27, %c0_28, %c0_29], %39 {strides = array<i32>} : memref<1x1x128xf32, #tpu.memory_space<vmem>>, vector<1x1x128xf32>,
    } else {
    }
    return
  }
  func.func @transform_0(%arg0: i32, %arg1: i32) -> (i32, i32, i32) {
    %c0_i32 = arith.constant 0 : i32
    %c0_i32_0 = arith.constant 0 : i32
    return %arg0, %arg1, %c0_i32 : i32, i32, i32
  }
  func.func @transform_1(%arg0: i32, %arg1: i32) -> (i32, i32) {
    %c0_i32 = arith.constant 0 : i32
    %c0_i32_0 = arith.constant 0 : i32
    %c0_i32_1 = arith.constant 0 : i32
    return %c0_i32, %c0_i32_0 : i32, i32
  }
  func.func @transform_2(%arg0: i32, %arg1: i32) -> (i32, i32) {
    %c0_i32 = arith.constant 0 : i32
    %c0_i32_0 = arith.constant 0 : i32
    %c0_i32_1 = arith.constant 0 : i32
    return %c0_i32, %c0_i32_0 : i32, i32
  }
  func.func @transform_3(%arg0: i32, %arg1: i32) -> (i32, i32) {
    %c0_i32 = arith.constant 0 : i32
    %c0_i32_0 = arith.constant 0 : i32
    %c0_i32_1 = arith.constant 0 : i32
    return %c0_i32, %c0_i32_0 : i32, i32
  }
  func.func @transform_4(%arg0: i32, %arg1: i32) -> (i32, i32) {
    %c0_i32 = arith.constant 0 : i32
    %c0_i32_0 = arith.constant 0 : i32
    %c0_i32_1 = arith.constant 0 : i32
    return %c0_i32, %c0_i32_0 : i32, i32
  }
  func.func @transform_5(%arg0: i32, %arg1: i32) -> (i32, i32, i32) {
    %c0_i32 = arith.constant 0 : i32
    %c0_i32_0 = arith.constant 0 : i32
    %c0_i32_1 = arith.constant 0 : i32
    return %arg0, %c0_i32, %c0_i32_0 : i32, i32, i32
  }
}

</mosaic_0001>

<llo_original>
// kernel: solider_extractor_forward.1
$region0: #{solider_extractor_forward.1}
  #allocation0 [shape = 'u32[]', space=smem, size = 0x4, offset = 0x4, fixed_abs, tag = 'smem constant byte address 0x4 - core index']
  #allocation1 [shape = 'u32[144,128]{1,0:T(1,128)}', space=vmem, size = 0x12000, scoped, tag = 'internal scratch']
  #allocation2 [shape = 'f32[1,128]{1,0:T(1,128)}', space=vmem, size = 0x200, scoped, tag = 'scratch operand']
  %s0 = inlined_call_operand.vmem [shape: bf16[2,16,128], index: 0, kind: input, shape index: {}]
  %s1 = inlined_call_operand.vmem [shape: bf16[128,128], index: 1, kind: input, shape index: {}]
  %s2 = inlined_call_operand.vmem [shape: f32[1,128], index: 2, kind: input, shape index: {}]
  %s3 = inlined_call_operand.vmem [shape: f32[128,128], index: 3, kind: input, shape index: {}]
  %s4 = inlined_call_operand.vmem [shape: f32[1,128], index: 4, kind: input, shape index: {}]
  %s5 = inlined_call_operand.hbm [shape: f32[2,1,128], index: 5, kind: output, shape index: {}]
  %s6 = sld [smem:[#allocation0]]
  $region61: #{solider_extractor_forward.1} parent=0
    _
  %s8 = ssub.s32 1, %s6
  %s9 = scalar_select 0, %s8, %s6
  $region1: #{solider_extractor_forward.1} parent=0
    #allocation3 [shape = 'u8[1024]{0}', space=vmem, size = 0x400, scoped, tag = 'output window, operand 0']
    #allocation4 [shape = 's32[2]{0}', space=sflag, size = 0x8, scoped, tag = 'scoped memory for solider_extractor_forward.1']
    %10 = vsyncpa [#allocation4], 0
    %s11 = scalar_lea.sflag [#allocation4], 1
    %12 = vsyncpa %s11, 0
    loop: start=0, step=1, limit=4
    $region2: #{solider_extractor_forward.1} parent=1 // loop_pre_header
      _
    $region3: #{solider_extractor_forward.1} parent=1 // loop_header
      %s14 = sphi 0, %s18
      %p15 = scmp.ge.s32.totalorder %s14, 4
      %s21 = sphi 0, %s33
      %s22 = sphi 0, %s29
      %s23 = sphi 0, %s21
      %s24 = sphi 0, %s22
      %s25 = sphi 0, %s23
      %s26 = sphi 0, %s24
      %s38 = sphi 0, %s40
      %s41 = sphi 0, %s38
      %s42 = sphi 0, %s41
      %s58 = sphi 0, %s42
      %s62 = sphi 0, %s62
      %s64 = sphi 0, %s62
      %s65 = sphi 0, %s64
      %s79 = sphi 0, %s65
      %s83 = sphi 0, %s83
      %s85 = sphi 0, %s83
      %s86 = sphi 0, %s85
      %s100 = sphi 0, %s86
      %s104 = sphi 0, %s104
      %s106 = sphi 0, %s104
      %s107 = sphi 0, %s106
      %s121 = sphi 0, %s107
      %s125 = sphi 0, %s125
      %s127 = sphi 0, %s125
      %s128 = sphi 0, %s127
      %s142 = sphi 0, %s128
      %s148 = sphi 0, %s150
      %s151 = sphi 0, %s148
      %s152 = sphi 0, %s151
      %s168 = sphi 0, %s152
    $region4: #{solider_extractor_forward.1} parent=1 // loop_header_branch
      %17 = sbr.rel (%p15) target = $region8
    $region5: #{solider_extractor_forward.1} parent=1 // loop_body
      %s19 = ssub.s32 %s14, 1
      %s20 = ssub.s32 %s14, 2
      %s27 = sadd.s32 1, %s22
      %p28 = scmp.ge.s32.totalorder %s27, 1
      %s29 = scalar_select %p28, 0, %s27
      %s30 = sadd.s32 1, %s21
      %s31 = scalar_select %p28, %s30, %s21
      %p32 = scmp.ge.s32.totalorder %s31, 2
      %s33 = scalar_select %p32, 0, %s31
      %s34 = ssub.s32 %s21, %s33
      %s35 = ssub.s32 %s22, %s29
      %s36 = sor.u32 %s34, %s35
      %p37 = scmp.eq.s32.totalorder %s36, 0
      %s39 = sadd.s32 %s38, 1
      %s40 = scalar_select %p37, %s38, %s39
      %p43 = pneg %p37
      %p44 = scmp.eq.s32.totalorder %s14, 1
      %p45 = por %p43, %p44
      %p46 = scmp.ne.s32.totalorder %s38, %s41
      %p47 = scmp.eq.s32.totalorder %s14, 0
      %p48 = por %p46, %p47
      %p49 = scmp.ne.s32.totalorder %s38, %s41
      %p50 = scmp.eq.s32.totalorder %s19, 1
      %p51 = por %p49, %p50
      %p52 = scmp.ne.s32.totalorder %s41, %s42
      %p53 = scmp.eq.s32.totalorder %s19, 0
      %p54 = por %p52, %p53
      %p55 = scmp.ne.s32.totalorder %s41, %s42
      %p56 = scmp.eq.s32.totalorder %s20, 1
      %p57 = por %p55, %p56
      %p59 = scmp.ne.s32.totalorder %s42, %s58
      %p60 = scmp.eq.s32.totalorder %s20, 0
      %p61 = por %p59, %p60
      %s63 = sadd.s32 %s62, 1
      %p66 = scmp.eq.s32.totalorder %s14, 1
      %p67 = scmp.ne.s32.totalorder %s62, %s64
      %p68 = scmp.eq.s32.totalorder %s14, 0
      %p69 = por %p67, %p68
      %p70 = scmp.ne.s32.totalorder %s62, %s64
      %p71 = scmp.eq.s32.totalorder %s19, 1
      %p72 = por %p70, %p71
      %p73 = scmp.ne.s32.totalorder %s64, %s65
      %p74 = scmp.eq.s32.totalorder %s19, 0
      %p75 = por %p73, %p74
      %p76 = scmp.ne.s32.totalorder %s64, %s65
      %p77 = scmp.eq.s32.totalorder %s20, 1
      %p78 = por %p76, %p77
      %p80 = scmp.ne.s32.totalorder %s65, %s79
      %p81 = scmp.eq.s32.totalorder %s20, 0
      %p82 = por %p80, %p81
      %s84 = sadd.s32 %s83, 1
      %p87 = scmp.eq.s32.totalorder %s14, 1
      %p88 = scmp.ne.s32.totalorder %s83, %s85
      %p89 = scmp.eq.s32.totalorder %s14, 0
      %p90 = por %p88, %p89
      %p91 = scmp.ne.s32.totalorder %s83, %s85
      %p92 = scmp.eq.s32.totalorder %s19, 1
      %p93 = por %p91, %p92
      %p94 = scmp.ne.s32.totalorder %s85, %s86
      %p95 = scmp.eq.s32.totalorder %s19, 0
      %p96 = por %p94, %p95
      %p97 = scmp.ne.s32.totalorder %s85, %s86
      %p98 = scmp.eq.s32.totalorder %s20, 1
      %p99 = por %p97, %p98
      %p101 = scmp.ne.s32.totalorder %s86, %s100
      %p102 = scmp.eq.s32.totalorder %s20, 0
      %p103 = por %p101, %p102
      %s105 = sadd.s32 %s104, 1
      %p108 = scmp.eq.s32.totalorder %s14, 1
      %p109 = scmp.ne.s32.totalorder %s104, %s106
      %p110 = scmp.eq.s32.totalorder %s14, 0
      %p111 = por %p109, %p110
      %p112 = scmp.ne.s32.totalorder %s104, %s106
      %p113 = scmp.eq.s32.totalorder %s19, 1
      %p114 = por %p112, %p113
      %p115 = scmp.ne.s32.totalorder %s106, %s107
      %p116 = scmp.eq.s32.totalorder %s19, 0
      %p117 = por %p115, %p116
      %p118 = scmp.ne.s32.totalorder %s106, %s107
      %p119 = scmp.eq.s32.totalorder %s20, 1
      %p120 = por %p118, %p119
      %p122 = scmp.ne.s32.totalorder %s107, %s121
      %p123 = scmp.eq.s32.totalorder %s20, 0
      %p124 = por %p122, %p123
      %s126 = sadd.s32 %s125, 1
      %p129 = scmp.eq.s32.totalorder %s14, 1
      %p130 = scmp.ne.s32.totalorder %s125, %s127
      %p131 = scmp.eq.s32.totalorder %s14, 0
      %p132 = por %p130, %p131
      %p133 = scmp.ne.s32.totalorder %s125, %s127
      %p134 = scmp.eq.s32.totalorder %s19, 1
      %p135 = por %p133, %p134
      %p136 = scmp.ne.s32.totalorder %s127, %s128
      %p137 = scmp.eq.s32.totalorder %s19, 0
      %p138 = por %p136, %p137
      %p139 = scmp.ne.s32.totalorder %s127, %s128
      %p140 = scmp.eq.s32.totalorder %s20, 1
      %p141 = por %p139, %p140
      %p143 = scmp.ne.s32.totalorder %s128, %s142
      %p144 = scmp.eq.s32.totalorder %s20, 0
      %p145 = por %p143, %p144
      %s146 = ssub.s32 %s21, %s33
      %p147 = scmp.eq.s32.totalorder %s146, 0
      %s149 = sadd.s32 %s148, 1
      %s150 = scalar_select %p147, %s148, %s149
      %p153 = pneg %p147
      %p154 = scmp.eq.s32.totalorder %s14, 1
      %p155 = por %p153, %p154
      %p156 = scmp.ne.s32.totalorder %s148, %s151
      %p157 = scmp.eq.s32.totalorder %s14, 0
      %p158 = por %p156, %p157
      %p159 = scmp.ne.s32.totalorder %s148, %s151
      %p160 = scmp.eq.s32.totalorder %s19, 1
      %p161 = por %p159, %p160
      %p162 = scmp.ne.s32.totalorder %s151, %s152
      %p163 = scmp.eq.s32.totalorder %s19, 0
      %p164 = por %p162, %p163
      %p165 = scmp.ne.s32.totalorder %s151, %s152
      %p166 = scmp.eq.s32.totalorder %s20, 1
      %p167 = por %p165, %p166
      %p169 = scmp.ne.s32.totalorder %s152, %s168
      %p170 = scmp.eq.s32.totalorder %s20, 0
      %p171 = por %p169, %p170
      %p172 = scmp.le.s32.totalorder 1, %s14
      %p173 = scmp.lt.s32.totalorder %s14, 3
      %p174 = pnand %p172, %p173
      %p175 = pneg %p174
      // Predicated region
      $region9: #{solider_extractor_forward.1} parent=5 // pred_check
        _
      $region10: #{solider_extractor_forward.1} parent=5 // pred_check_branch
        %177 = sbr.rel (%p174) target = $region12
      $region11: #{solider_extractor_forward.1} parent=5 // pred_region
        %s178 = ssub.s32 %s14, 1
        // Predicated region
        $region13: #{solider_extractor_forward.1} parent=11 // pred_check
          %p179 = pneg %p75
        $region14: #{solider_extractor_forward.1} parent=11 // pred_check_branch
          %181 = sbr.rel (%p179) target = $region16
        $region15: #{solider_extractor_forward.1} parent=11 // pred_region
          _
        $region16: #{solider_extractor_forward.1} parent=11 // pred_fallthru
          _
        // Predicated region
        $region17: #{solider_extractor_forward.1} parent=11 // pred_check
          %p182 = pneg %p96
        $region18: #{solider_extractor_forward.1} parent=11 // pred_check_branch
          %184 = sbr.rel (%p182) target = $region20
        $region19: #{solider_extractor_forward.1} parent=11 // pred_region
          _
        $region20: #{solider_extractor_forward.1} parent=11 // pred_fallthru
          _
        // Predicated region
        $region21: #{solider_extractor_forward.1} parent=11 // pred_check
          %p185 = pneg %p117
        $region22: #{solider_extractor_forward.1} parent=11 // pred_check_branch
          %187 = sbr.rel (%p185) target = $region24
        $region23: #{solider_extractor_forward.1} parent=11 // pred_region
          _
        $region24: #{solider_extractor_forward.1} parent=11 // pred_fallthru
          _
        // Predicated region
        $region25: #{solider_extractor_forward.1} parent=11 // pred_check
          %p188 = pneg %p138
        $region26: #{solider_extractor_forward.1} parent=11 // pred_check_branch
          %190 = sbr.rel (%p188) target = $region28
        $region27: #{solider_extractor_forward.1} parent=11 // pred_region
          _
        $region28: #{solider_extractor_forward.1} parent=11 // pred_fallthru
          _
      $region12: #{solider_extractor_forward.1} parent=5 // pred_fallthru
        _
      %p191 = scmp.lt.s32.totalorder %s14, 2
      // Predicated region
      $region29: #{solider_extractor_forward.1} parent=5 // pred_check
        %p192 = pneg %p191
      $region30: #{solider_extractor_forward.1} parent=5 // pred_check_branch
        %194 = sbr.rel (%p192) target = $region32
      $region31: #{solider_extractor_forward.1} parent=5 // pred_region
        // Predicated region
        $region33: #{solider_extractor_forward.1} parent=31 // pred_check
          %p195 = pneg %p48
        $region34: #{solider_extractor_forward.1} parent=31 // pred_check_branch
          %197 = sbr.rel (%p195) target = $region36
        $region35: #{solider_extractor_forward.1} parent=31 // pred_region
          %s198 = smul.u32 2, %s22
          %p199 = scmp.lt.s32.totalorder %s21, 1
          %s200 = scalar_select %p199, %s21, 1
          %p201 = scmp.lt.s32.totalorder %s198, 1
          %s202 = scalar_select %p201, %s198, 1
          %s203 = smul.addr %s200, 2
          %s204 = sadd.s32 %s202, %s203
          %s205 = smul.addr %s204, 4
          %s206 = scalar_lea.vmem %s0, %s205
          %s207 = smul.u32 2, %s22
        $region36: #{solider_extractor_forward.1} parent=31 // pred_fallthru
          _
      $region32: #{solider_extractor_forward.1} parent=5 // pred_fallthru
        _
      %p208 = scmp.le.s32.totalorder 1, %s14
      %p209 = scmp.lt.s32.totalorder %s14, 3
      %p210 = pnand %p208, %p209
      %p211 = pneg %p210
      // Predicated region
      $region37: #{solider_extractor_forward.1} parent=5 // pred_check
        _
      $region38: #{solider_extractor_forward.1} parent=5 // pred_check_branch
        %213 = sbr.rel (%p210) target = $region40
      $region39: #{solider_extractor_forward.1} parent=5 // pred_region
        %s214 = ssub.s32 %s14, 1
        %s215 = smul.u32 2, %s24
        %p216 = scmp.lt.s32.totalorder %s23, 1
        %s217 = scalar_select %p216, %s23, 1
        %p218 = scmp.lt.s32.totalorder %s215, 1
        %s219 = scalar_select %p218, %s215, 1
        %s220 = smul.addr %s217, 2
        %s221 = sadd.s32 %s219, %s220
        %s222 = smul.addr %s221, 4
        %s223 = scalar_lea.vmem %s0, %s222
        %p224 = pneg %p54
        %p225 = pneg %p51
        %p226 = pneg %p75
        %p227 = pneg %p72
        %p228 = pneg %p96
        %p229 = pneg %p93
        %p230 = pneg %p117
        %p231 = pneg %p114
        %p232 = pneg %p138
        %p233 = pneg %p135
        %p234 = pneg %p164
        %p235 = pneg %p161
        %s236 = sand.u32 %s151, 1
        %s237 = scalar_lea.sflag [#allocation4], %s236
        %s238 = sand.u32 %s151, 1
        %s239 = scalar_lea.vmem [#allocation3], %s238
        %s240 = smul.u32 2, %s24
        %p241 = scmp.lt.s32.totalorder %s23, 1
        %s242 = scalar_select %p241, %s23, 1
        %p243 = scmp.lt.s32.totalorder %s240, 1
        %s244 = scalar_select %p243, %s240, 1
        %s245 = smul.addr %s242, 2
        %s246 = sadd.s32 %s244, %s245
        %s247 = smul.addr %s246, 4
        %s248 = scalar_lea.vmem %s0, %s247
        %s249 = smul.u32 2, %s24
        %p251 = scmp.eq.s32.totalorder %s24, 0
        // Predicated region
        $region41: #{solider_extractor_forward.1} parent=39 // pred_check
          %p252 = pneg %p251
        $region42: #{solider_extractor_forward.1} parent=39 // pred_check_branch
          %254 = sbr.rel (%p252) target = $region44
        $region43: #{solider_extractor_forward.1} parent=39 // pred_region
          %255 = vst [vmem:[#allocation2] sm:$0x1] 0.0
        $region44: #{solider_extractor_forward.1} parent=39 // pred_fallthru
          _
        %v256 = vld [vmem:[%s248] sm:$0xf]
        %v257 = vld [vmem:[%s248 + $0x4] sm:$0xf]
        %v258 = vld [vmem:[%s1] sm:$0xf]
        %v259 = vld [vmem:[%s1 + $0x4] sm:$0xf]
        %v260 = vld [vmem:[%s1 + $0x8] sm:$0xf]
        %v261 = vld [vmem:[%s1 + $0xc] sm:$0xf]
        %v262 = vld [vmem:[%s1 + $0x10] sm:$0xf]
        %v263 = vld [vmem:[%s1 + $0x14] sm:$0xf]
        %v264 = vld [vmem:[%s1 + $0x18] sm:$0xf]
        %v265 = vld [vmem:[%s1 + $0x1c] sm:$0xf]
        %v266 = vld [vmem:[%s1 + $0x20] sm:$0xf]
        %v267 = vld [vmem:[%s1 + $0x24] sm:$0xf]
        %v268 = vld [vmem:[%s1 + $0x28] sm:$0xf]
        %v269 = vld [vmem:[%s1 + $0x2c] sm:$0xf]
        %v270 = vld [vmem:[%s1 + $0x30] sm:$0xf]
        %v271 = vld [vmem:[%s1 + $0x34] sm:$0xf]
        %v272 = vld [vmem:[%s1 + $0x38] sm:$0xf]
        %v273 = vld [vmem:[%s1 + $0x3c] sm:$0xf]
        %v276 = vunpack.c.l.b16 %v256
        %v277 = vunpack.c.l.b16 %v257
        %v278 = vpack.c.b16 %v277, %v276
        %v296 = vunpack.c.l.b16 %v258
        %v297 = vunpack.c.l.b16 %v259
        %v298 = vunpack.c.l.b16 %v260
        %v299 = vunpack.c.l.b16 %v261
        %v300 = vunpack.c.l.b16 %v262
        %v301 = vunpack.c.l.b16 %v263
        %v302 = vunpack.c.l.b16 %v264
        %v303 = vunpack.c.l.b16 %v265
        %v304 = vunpack.c.l.b16 %v266
        %v305 = vunpack.c.l.b16 %v267
        %v306 = vunpack.c.l.b16 %v268
        %v307 = vunpack.c.l.b16 %v269
        %v308 = vunpack.c.l.b16 %v270
        %v309 = vunpack.c.l.b16 %v271
        %v310 = vunpack.c.l.b16 %v272
        %v311 = vunpack.c.l.b16 %v273
        %v312 = vpack.c.b16 %v297, %v296
        %v313 = vpack.c.b16 %v299, %v298
        %v314 = vpack.c.b16 %v301, %v300
        %v315 = vpack.c.b16 %v303, %v302
        %v316 = vpack.c.b16 %v305, %v304
        %v317 = vpack.c.b16 %v307, %v306
        %v318 = vpack.c.b16 %v309, %v308
        %v319 = vpack.c.b16 %v311, %v310
        %328 = vmatprep.subr.bf16.mxu0 0
        %329 = vmatpush1.bf16.msra.mxu0 %v312
        %330 = vmatprep.subr.bf16.mxu0 0
        %331 = vmatpush1.bf16.msra.mxu0 %v313
        %332 = vmatprep.subr.bf16.mxu0 0
        %333 = vmatpush1.bf16.msra.mxu0 %v314
        %334 = vmatprep.subr.bf16.mxu0 0
        %335 = vmatpush1.bf16.msra.mxu0 %v315
        %336 = vmatprep.subr.bf16.mxu0 0
        %337 = vmatpush1.bf16.msra.mxu0 %v316
        %338 = vmatprep.subr.bf16.mxu0 0
        %339 = vmatpush1.bf16.msra.mxu0 %v317
        %340 = vmatprep.subr.bf16.mxu0 0
        %341 = vmatpush1.bf16.msra.mxu0 %v318
        %342 = vmatprep.subr.bf16.mxu0 0
        %343 = vmatpush1.bf16.msra.mxu0 %v319
        %344 = vmatprep.subr.bf16.mxu0 0
        %345 = vmatpush1.bf16.msra.mxu0 0
        %346 = vmatprep.subr.bf16.mxu0 0
        %347 = vmatpush1.bf16.msra.mxu0 0
        %348 = vmatprep.subr.bf16.mxu0 0
        %349 = vmatpush1.bf16.msra.mxu0 0
        %350 = vmatprep.subr.bf16.mxu0 0
        %351 = vmatpush1.bf16.msra.mxu0 0
        %352 = vmatprep.subr.bf16.mxu0 0
        %353 = vmatpush1.bf16.msra.mxu0 0
        %354 = vmatprep.subr.bf16.mxu0 0
        %355 = vmatpush1.bf16.msra.mxu0 0
        %356 = vmatprep.subr.bf16.mxu0 0
        %357 = vmatpush1.bf16.msra.mxu0 0
        %358 = vmatprep.subr.bf16.mxu0 0
        %359 = vmatpush1.bf16.msra.mxu0 0
        %360 = vmatprep.mubr.bf16.mxu0 0
        %361 = vmatmul.mubr.bf16.gmra.mrb[0].mxu0 %v278
        %v362 = vpop.f32.mrb[0].mxu0
        %v363 = vadd.f32 0.0, %v362
        %v364 = vpop.f32.mrb[0].mxu0
        %v365 = vpop.f32.mrb[0].mxu0
        %v366 = vadd.f32 0.0, %v365
        %v367 = vpop.f32.mrb[0].mxu0
        %368 = vdwg.mxu0
        %v369 = vld [vmem:[#allocation2] sm:$0x1]
        %vm370 = vcmask 130048
        %v372 = vsel %vm370, 1.0, 0
        %374 = vmatprep.subr.mxu0 0.0
        %375 = vmatpush1.msra.mxu0 %v363
        %376 = vmatprep.subr.mxu0 0.0
        %377 = vmatpush1.msra.mxu0 %v366
        %378 = vmatprep.subr.mxu0 0.0
        %379 = vmatpush1.msra.mxu0 0.0
        %380 = vmatprep.subr.mxu0 0.0
        %381 = vmatpush1.msra.mxu0 0.0
        %382 = vmatprep.subr.mxu0 0.0
        %383 = vmatpush1.msra.mxu0 0.0
        %384 = vmatprep.subr.mxu0 0.0
        %385 = vmatpush1.msra.mxu0 0.0
        %386 = vmatprep.subr.mxu0 0.0
        %387 = vmatpush1.msra.mxu0 0.0
        %388 = vmatprep.subr.mxu0 0.0
        %389 = vmatpush1.msra.mxu0 0.0
        %390 = vmatprep.subr.mxu0 0.0
        %391 = vmatpush1.msra.mxu0 0.0
        %392 = vmatprep.subr.mxu0 0.0
        %393 = vmatpush1.msra.mxu0 0.0
        %394 = vmatprep.subr.mxu0 0.0
        %395 = vmatpush1.msra.mxu0 0.0
        %396 = vmatprep.subr.mxu0 0.0
        %397 = vmatpush1.msra.mxu0 0.0
        %398 = vmatprep.subr.mxu0 0.0
        %399 = vmatpush1.msra.mxu0 0.0
        %400 = vmatprep.subr.mxu0 0.0
        %401 = vmatpush1.msra.mxu0 0.0
        %402 = vmatprep.subr.mxu0 0.0
        %403 = vmatpush1.msra.mxu0 0.0
        %404 = vmatprep.subr.mxu0 0.0
        %405 = vmatpush1.msra.mxu0 0.0
        %406 = vmatprep.subr.mxu0 0.0
        %407 = vmatpush1.msra.mxu0 0.0
        %408 = vmatprep.subr.mxu0 0.0
        %409 = vmatpush1.msra.mxu0 0.0
        %410 = vmatprep.subr.mxu0 0.0
        %411 = vmatpush1.msra.mxu0 0.0
        %412 = vmatprep.subr.mxu0 0.0
        %413 = vmatpush1.msra.mxu0 0.0
        %414 = vmatprep.subr.mxu0 0.0
        %415 = vmatpush1.msra.mxu0 0.0
        %416 = vmatprep.subr.mxu0 0.0
        %417 = vmatpush1.msra.mxu0 0.0
        %418 = vmatprep.subr.mxu0 0.0
        %419 = vmatpush1.msra.mxu0 0.0
        %420 = vmatprep.subr.mxu0 0.0
        %421 = vmatpush1.msra.mxu0 0.0
        %422 = vmatprep.subr.mxu0 0.0
        %423 = vmatpush1.msra.mxu0 0.0
        %424 = vmatprep.subr.mxu0 0.0
        %425 = vmatpush1.msra.mxu0 0.0
        %426 = vmatprep.subr.mxu0 0.0
        %427 = vmatpush1.msra.mxu0 0.0
        %428 = vmatprep.subr.mxu0 0.0
        %429 = vmatpush1.msra.mxu0 0.0
        %430 = vmatprep.subr.mxu0 0.0
        %431 = vmatpush1.msra.mxu0 0.0
        %432 = vmatprep.subr.mxu0 0.0
        %433 = vmatpush1.msra.mxu0 0.0
        %434 = vmatprep.subr.mxu0 0.0
        %435 = vmatpush1.msra.mxu0 0.0
        %436 = vmatprep.subr.mxu0 0.0
        %437 = vmatpush1.msra.mxu0 0.0
        %438 = vmatprep.mubr.f32.mxu0 0.0
        %439 = vmatmul.mubr.f32.gmra.mrb[0].mxu0 %v372
        %v440 = vpop.f32.mrb[0].mxu0
        %v441 = vadd.f32 0.0, %v440
        %v442 = vpop.f32.mrb[0].mxu0
        %443 = vdwg.mxu0
        %v444 = vadd.f32 %v369, %v441
        %445 = vst [vmem:[#allocation2] sm:$0x1] %v444
        // Predicated region
        $region45: #{solider_extractor_forward.1} parent=39 // pred_check
          %p446 = pneg %p251
        $region46: #{solider_extractor_forward.1} parent=39 // pred_check_branch
          %448 = sbr.rel (%p446) target = $region48
        $region47: #{solider_extractor_forward.1} parent=39 // pred_region
          %v449 = vld [vmem:[#allocation2] sm:$0x1]
          %v450 = vmul.f32 %v449, 0.0625
          %v451 = vld [vmem:[%s2] sm:$0x1]
          %v452 = vadd.f32 %v450, %v451
          %v453 = vld [vmem:[%s3] sm:$0xff]
          %v454 = vld [vmem:[%s3 + $0x8] sm:$0xff]
          %v455 = vld [vmem:[%s3 + $0x10] sm:$0xff]
          %v456 = vld [vmem:[%s3 + $0x18] sm:$0xff]
          %v457 = vld [vmem:[%s3 + $0x20] sm:$0xff]
          %v458 = vld [vmem:[%s3 + $0x28] sm:$0xff]
          %v459 = vld [vmem:[%s3 + $0x30] sm:$0xff]
          %v460 = vld [vmem:[%s3 + $0x38] sm:$0xff]
          %v461 = vld [vmem:[%s3 + $0x40] sm:$0xff]
          %v462 = vld [vmem:[%s3 + $0x48] sm:$0xff]
          %v463 = vld [vmem:[%s3 + $0x50] sm:$0xff]
          %v464 = vld [vmem:[%s3 + $0x58] sm:$0xff]
          %v465 = vld [vmem:[%s3 + $0x60] sm:$0xff]
          %v466 = vld [vmem:[%s3 + $0x68] sm:$0xff]
          %v467 = vld [vmem:[%s3 + $0x70] sm:$0xff]
          %v468 = vld [vmem:[%s3 + $0x78] sm:$0xff]
          %v469 = vld [vmem:[%s4] sm:$0x1]
          %470 = vmatprep.subr.mxu0 0.0
          %471 = vmatpush1.msra.mxu0 %v453
          %472 = vmatprep.subr.mxu0 0.0
          %473 = vmatpush1.msra.mxu0 %v454
          %474 = vmatprep.subr.mxu0 0.0
          %475 = vmatpush1.msra.mxu0 %v455
          %476 = vmatprep.subr.mxu0 0.0
          %477 = vmatpush1.msra.mxu0 %v456
          %478 = vmatprep.subr.mxu0 0.0
          %479 = vmatpush1.msra.mxu0 %v457
          %480 = vmatprep.subr.mxu0 0.0
          %481 = vmatpush1.msra.mxu0 %v458
          %482 = vmatprep.subr.mxu0 0.0
          %483 = vmatpush1.msra.mxu0 %v459
          %484 = vmatprep.subr.mxu0 0.0
          %485 = vmatpush1.msra.mxu0 %v460
          %486 = vmatprep.subr.mxu0 0.0
          %487 = vmatpush1.msra.mxu0 %v461
          %488 = vmatprep.subr.mxu0 0.0
          %489 = vmatpush1.msra.mxu0 %v462
          %490 = vmatprep.subr.mxu0 0.0
          %491 = vmatpush1.msra.mxu0 %v463
          %492 = vmatprep.subr.mxu0 0.0
          %493 = vmatpush1.msra.mxu0 %v464
          %494 = vmatprep.subr.mxu0 0.0
          %495 = vmatpush1.msra.mxu0 %v465
          %496 = vmatprep.subr.mxu0 0.0
          %497 = vmatpush1.msra.mxu0 %v466
          %498 = vmatprep.subr.mxu0 0.0
          %499 = vmatpush1.msra.mxu0 %v467
          %500 = vmatprep.subr.mxu0 0.0
          %501 = vmatpush1.msra.mxu0 %v468
          %502 = vmatprep.subr.mxu0 0.0
          %503 = vmatpush1.msra.mxu0 0.0
          %504 = vmatprep.subr.mxu0 0.0
          %505 = vmatpush1.msra.mxu0 0.0
          %506 = vmatprep.subr.mxu0 0.0
          %507 = vmatpush1.msra.mxu0 0.0
          %508 = vmatprep.subr.mxu0 0.0
          %509 = vmatpush1.msra.mxu0 0.0
          %510 = vmatprep.subr.mxu0 0.0
          %511 = vmatpush1.msra.mxu0 0.0
          %512 = vmatprep.subr.mxu0 0.0
          %513 = vmatpush1.msra.mxu0 0.0
          %514 = vmatprep.subr.mxu0 0.0
          %515 = vmatpush1.msra.mxu0 0.0
          %516 = vmatprep.subr.mxu0 0.0
          %517 = vmatpush1.msra.mxu0 0.0
          %518 = vmatprep.subr.mxu0 0.0
          %519 = vmatpush1.msra.mxu0 0.0
          %520 = vmatprep.subr.mxu0 0.0
          %521 = vmatpush1.msra.mxu0 0.0
          %522 = vmatprep.subr.mxu0 0.0
          %523 = vmatpush1.msra.mxu0 0.0
          %524 = vmatprep.subr.mxu0 0.0
          %525 = vmatpush1.msra.mxu0 0.0
          %526 = vmatprep.subr.mxu0 0.0
          %527 = vmatpush1.msra.mxu0 0.0
          %528 = vmatprep.subr.mxu0 0.0
          %529 = vmatpush1.msra.mxu0 0.0
          %530 = vmatprep.subr.mxu0 0.0
          %531 = vmatpush1.msra.mxu0 0.0
          %532 = vmatprep.subr.mxu0 0.0
          %533 = vmatpush1.msra.mxu0 0.0
          %534 = vmatprep.mubr.f32.mxu0 0.0
          %535 = vmatmul.mubr.f32.gmra.mrb[0].mxu0 %v452
          %v536 = vpop.f32.mrb[0].mxu0
          %v537 = vadd.f32 %v469, %v536
          %v538 = vpop.f32.mrb[0].mxu0
          %539 = vdwg.mxu0
          %v540 = vand.u32 2147483647, %v537
          %vm541 = vcmp.eq.f32.partialorder %v540, inf
          %v542 = vsel %vm541, 1.0, %v537
          %v543 = vmul.f32 %v542, %v542
          %vm544 = vcmask 1040384
          %v545 = vsel %vm544, %v543, 0.0
          %546 = vadd.xlane.f32.xlu0 %v545
          %v547 = vpop.xlane.xlu0 %546
          %v548 = vmax.f32 %v547, 1e-24
          %v549 = vrsqrt.pop %v548
          %v550 = vmul.f32 %v542, %v549
          %551 = vst [vmem:[%s239] sm:$0x1] %v550
        $region48: #{solider_extractor_forward.1} parent=39 // pred_fallthru
          _
        %s552 = sand.u32 %s151, 1
        %s553 = scalar_lea.sflag [#allocation4], %s552
        %s554 = sand.u32 %s151, 1
        %s555 = scalar_lea.vmem [#allocation3], %s554
        // Predicated region
        $region49: #{solider_extractor_forward.1} parent=39 // pred_check
          %p556 = pneg %p161
        $region50: #{solider_extractor_forward.1} parent=39 // pred_check_branch
          %558 = sbr.rel (%p556) target = $region52
        $region51: #{solider_extractor_forward.1} parent=39 // pred_region
          %s560 = ssub.s32 16, 16
          %561 = vsyncadd %s553, %s560
          %s562 = smul.addr %s23, 16
          %s563 = scalar_lea.hbm %s5, %s562
          %s565 = sshll.u32 %s555, 4
          %s566 = int_to_ptr.vmem [resolvable:$true] %s565
          %568 = dma.vmem_to_hbm [thread:$0]  %s566, 16, %s563, %s553
        $region52: #{solider_extractor_forward.1} parent=39 // pred_fallthru
          _
      $region40: #{solider_extractor_forward.1} parent=5 // pred_fallthru
        _
      %p569 = scmp.le.s32.totalorder 2, %s14
      // Predicated region
      $region53: #{solider_extractor_forward.1} parent=5 // pred_check
        %p570 = pneg %p569
      $region54: #{solider_extractor_forward.1} parent=5 // pred_check_branch
        %572 = sbr.rel (%p570) target = $region56
      $region55: #{solider_extractor_forward.1} parent=5 // pred_region
        %s573 = ssub.s32 %s14, 2
        // Predicated region
        $region57: #{solider_extractor_forward.1} parent=55 // pred_check
          %p574 = pneg %p167
        $region58: #{solider_extractor_forward.1} parent=55 // pred_check_branch
          %576 = sbr.rel (%p574) target = $region60
        $region59: #{solider_extractor_forward.1} parent=55 // pred_region
          %s577 = sand.u32 %s152, 1
          %s578 = scalar_lea.sflag [#allocation4], %s577
          %s579 = sand.u32 %s152, 1
          %s580 = scalar_lea.vmem [#allocation3], %s579
          %581 = dma.done %s578, 16
        $region60: #{solider_extractor_forward.1} parent=55 // pred_fallthru
          _
      $region56: #{solider_extractor_forward.1} parent=5 // pred_fallthru
        _
    $region6: #{solider_extractor_forward.1} parent=1 // loop_footer
      %s18 = sadd.s32 1, %s14
    $region7: #{solider_extractor_forward.1} parent=1 // loop_footer_branch
      %13 = sbr.rel target = $region3
    $region8: #{solider_extractor_forward.1} parent=1 // loop_exit
      _
    %582 = vsyncpa [#allocation4], 1
    %s583 = scalar_lea.sflag [#allocation4], 1
    %584 = vsyncpa %s583, 1

</llo_original>
